<compile_context>
chip_gen: v7x
topology: tpu7x:2x2x1
jax: 0.10.0
libtpu: 0.0.40
codegen_flags: <defaults>
</compile_context>

<pallas_src>
import jax
import jax.numpy as jnp
from jax.experimental import pallas as pl
from jax.experimental.pallas import tpu as pltpu


def _round_up(v, m):
    return (v + m - 1) // m * m


def _fused_head_kernel(x_ref, w_t_ref, b_t_ref, o_ref):
    # x_ref  : (tb, input_size)   activation tile (batch rows on sublanes)
    # w_t_ref: (n8, input_size)   fused, transposed weights (VMEM-resident)
    # b_t_ref: (n8, 1)            fused bias column (VMEM-resident)
    # o_ref  : (n8, tb)           transposed output tile (batch on the lane axis)
    x = jnp.maximum(x_ref[...], 0.0)                      # ReLU on VPU (f32)
    # out^T = W_fused^T @ relu(x)^T : contract the feature dim of both operands
    # (same pattern as q @ k^T), single MXU pass, f32 accumulate.
    acc = jax.lax.dot_general(
        w_t_ref[...], x,
        dimension_numbers=(((1,), (1,)), ((), ())),
        preferred_element_type=jnp.float32)
    o_ref[...] = (acc + b_t_ref[...]).astype(o_ref.dtype)  # lane-dense store


def fuse_params(params):
    """One-time fusion of the three heads into a single transposed weight slab.

    Do this ONCE (at init / param load), not per forward call."""
    wp, bp = params["w_poses"], params["b_poses"]
    ws, bs = params["w_shape"], params["b_shape"]
    wt, bt = params["w_texture"], params["b_texture"]
    n_poses = int(wp.shape[1])
    n_coeff = int(ws.shape[1])
    n_total = n_poses + 2 * n_coeff
    n8 = _round_up(n_total, 8)                             # pad to 8 sublanes only
    w_fused_t = jnp.concatenate([wp, ws, wt], axis=1).T    # (n_total, input_size)
    w_fused_t = jnp.pad(w_fused_t, ((0, n8 - n_total), (0, 0)))
    b_fused_t = jnp.concatenate([bp, bs, bt]).reshape(n_total, 1)
    b_fused_t = jnp.pad(b_fused_t, ((0, n8 - n_total), (0, 0)))
    return {
        "w_fused_t": w_fused_t,      # (n8, input_size)
        "b_fused_t": b_fused_t,      # (n8, 1)
        "n_poses": n_poses,
        "n_coeff": n_coeff,
    }


def new_branch_forward(inputs, fused_params, *, use_pallas=None):
    """inputs: (anything, x) with x of shape (B, input_size, 1, 1).
    fused_params: output of fuse_params()."""
    _, x = inputs
    # Glue: the two squeeze(2) calls from the PyTorch module (reshape only).
    x = jnp.squeeze(jnp.squeeze(x, axis=2), axis=2)        # (B, input_size)
    B, input_size = x.shape

    w_t = fused_params["w_fused_t"]                        # (n8, input_size)
    b_t = fused_params["b_fused_t"]                        # (n8, 1)
    n_poses = fused_params["n_poses"]
    n_coeff = fused_params["n_coeff"]
    n_total = n_poses + 2 * n_coeff
    n8 = w_t.shape[0]

    # Small-problem fallback: the fixed pallas_call + DMA setup cost dominates
    # sub-microsecond work; plain fused XLA is faster there.
    if use_pallas is None:
        use_pallas = (B * input_size) >= 8192

    if not use_pallas:
        out = jnp.maximum(x, 0.0) @ w_t.T + b_t.T          # (B, n8)
    else:
        itemsize = jnp.dtype(x.dtype).itemsize

        # Pad the batch only to the next multiple of 8 sublanes (<= 7 rows).
        b8 = _round_up(B, 8)
        if b8 != B:
            x = jnp.pad(x, ((0, b8 - B), (0, 0)))

        # Batch tile = lane axis of the transposed output, so multiples of 128
        # (or the full batch when it is too small to split).  Large tiles
        # (up to 4096) amortize the ~0.35 us per-grid-step cost; the adaptive
        # cap keeps the double-buffered x+out working set ~<12 MiB on every
        # generation.  When b8 allows two 128-wide tiles we force grid >= 2 so
        # v7x's second TensorCore is used.
        TB_MAX = 4096
        vmem_budget = 12 * 1024 * 1024
        row_bytes = itemsize * (input_size + n8)
        tb_cap = max(128, (vmem_budget // (2 * row_bytes)) // 128 * 128)
        if b8 < 256:
            tb = b8                                        # single full block
        else:
            tb = min(TB_MAX, tb_cap, _round_up(pl.cdiv(b8, 2), 128))
        grid_steps = pl.cdiv(b8, tb)

        cost = pl.CostEstimate(
            flops=2 * b8 * input_size * n8,
            transcendentals=0,
            bytes_accessed=(b8 * input_size                # x
                            + n8 * input_size              # fused W^T
                            + n8                           # fused bias
                            + n8 * b8) * itemsize,         # transposed output
        )

        out_t = pl.pallas_call(
            _fused_head_kernel,
            out_shape=jax.ShapeDtypeStruct((n8, b8), x.dtype),
            grid=(grid_steps,),
            in_specs=[
                # activations: tiled over batch rows (pipelined DMA)
                pl.BlockSpec((tb, input_size), lambda i: (i, 0)),
                # fused weights / bias: constant index_map -> VMEM-resident
                pl.BlockSpec((n8, input_size), lambda i: (0, 0)),
                pl.BlockSpec((n8, 1), lambda i: (0, 0)),
            ],
            # batch on the lane axis -> lane-dense store, only 8-sublane pad
            out_specs=pl.BlockSpec((n8, tb), lambda i: (0, i)),
            compiler_params=pltpu.CompilerParams(
                dimension_semantics=("parallel",),
                vmem_limit_bytes=32 * 1024 * 1024),
            cost_estimate=cost,
        )(x, w_t, b_t)

        out = out_t[:, :B].T                               # (B, n8), tiny readback

    # Slice the three logical outputs (padded rows/columns are discarded).
    out_poses = out[:, :n_poses]
    out_shape = out[:, n_poses:n_poses + n_coeff]
    out_texture = out[:, n_poses + n_coeff:n_total]
    return out_poses, out_shape, out_texture


def init_params(key, input_size, coeff_count, dtype=jnp.float32):
    """Deterministic init mimicking nn.Linear default: U(-1/sqrt(in), 1/sqrt(in)).
    Weights are stored transposed relative to PyTorch's nn.Linear ((in, out))."""
    bound = 1.0 / (input_size ** 0.5)
    ks = jax.random.split(key, 6)
    u = lambda k, shape: jax.random.uniform(k, shape, dtype, minval=-bound, maxval=bound)
    return {
        "w_poses":   u(ks[0], (input_size, 2)),
        "b_poses":   u(ks[1], (2,)),
        "w_shape":   u(ks[2], (input_size, coeff_count)),
        "b_shape":   u(ks[3], (coeff_count,)),
        "w_texture": u(ks[4], (input_size, coeff_count)),
        "b_texture": u(ks[5], (coeff_count,)),
    }


def _reference(x, params):
    xs = jnp.squeeze(jnp.squeeze(x, 2), 2)
    r = jnp.maximum(xs, 0.0)
    return (r @ params["w_poses"] + params["b_poses"],
            r @ params["w_shape"] + params["b_shape"],
            r @ params["w_texture"] + params["b_texture"])


if __name__ == "__main__":
    B, input_size, coeff_count = 2, 32, 8

    key = jax.random.PRNGKey(0)
    k_x, k_p, k_x2 = jax.random.split(key, 3)

    # x comes in NCHW-like shape (B, input_size, 1, 1), matching the squeezes.
    x = jax.random.normal(k_x, (B, input_size, 1, 1), dtype=jnp.float32)
    dummy = jnp.zeros((1,), dtype=jnp.float32)   # first element of `inputs` is unused
    params = init_params(k_p, input_size, coeff_count)
    fused = fuse_params(params)                  # one-time fusion, outside the call path

    # Small shape: force the Pallas path so the kernel itself runs and is checked
    # (auto mode would take the jnp fallback for B*input_size this small).
    out_poses, out_shape, out_texture = new_branch_forward(
        (dummy, x), fused, use_pallas=True)
    jax.block_until_ready((out_poses, out_shape, out_texture))

    ref_p, ref_s, ref_t = _reference(x, params)
    assert out_poses.shape == (B, 2)
    assert out_shape.shape == (B, coeff_count)
    assert out_texture.shape == (B, coeff_count)
    assert jnp.allclose(out_poses, ref_p, atol=1e-5)
    assert jnp.allclose(out_shape, ref_s, atol=1e-5)
    assert jnp.allclose(out_texture, ref_t, atol=1e-5)

    # Moderate batch: exercises the auto Pallas path with a >=2-step tiled grid
    # (b8=512, tb=256 -> grid=(2,)) and the lane-dense transposed output store.
    B2 = 512
    x2 = jax.random.normal(k_x2, (B2, input_size, 1, 1), dtype=jnp.float32)
    o2 = new_branch_forward((dummy, x2), fused)
    jax.block_until_ready(o2)
    r2_p, r2_s, r2_t = _reference(x2, params)
    assert jnp.allclose(o2[0], r2_p, atol=1e-5)
    assert jnp.allclose(o2[1], r2_s, atol=1e-5)
    assert jnp.allclose(o2[2], r2_t, atol=1e-5)

    print("KERNEL_OK")
</pallas_src>

<mosaic_0001>
module attributes {stable_mosaic.version = 11 : i64} {
  func.func @_fused_head_kernel(%arg0: i32, %arg1: memref<8x32xf32, #tpu.memory_space<vmem>>, %arg2: memref<24x32xf32, #tpu.memory_space<vmem>>, %arg3: memref<24x1xf32, #tpu.memory_space<vmem>>, %arg4: memref<24x8xf32, #tpu.memory_space<vmem>>) attributes {dimension_semantics = [#tpu.dimension_semantics<parallel>], iteration_bounds = array<i64: 1>, scalar_prefetch = 0 : i64, scratch_operands = 0 : i64, tpu.core_type = #tpu.core_type<tc>, window_params = [{transform_indices = @transform_0, window_bounds = array<i64: 8, 32>}, {pipeline_mode = #tpu.pipeline_mode<synchronous>, transform_indices = @transform_1, window_bounds = array<i64: 24, 32>}, {pipeline_mode = #tpu.pipeline_mode<synchronous>, transform_indices = @transform_2, window_bounds = array<i64: 24, 1>}, {transform_indices = @transform_3, window_bounds = array<i64: 24, 8>}]} {
    %c0 = arith.constant 0 : index
    %c0_0 = arith.constant 0 : index
    %0 = vector.load %arg1[%c0, %c0_0] : memref<8x32xf32, #tpu.memory_space<vmem>>, vector<8x32xf32>
    %cst = arith.constant 0.000000e+00 : f32
    %1 = vector.broadcast %cst : f32 to vector<8x32xf32>
    %2 = arith.maximumf %0, %1 : vector<8x32xf32>
    %c0_1 = arith.constant 0 : index
    %c0_2 = arith.constant 0 : index
    %3 = vector.load %arg2[%c0_1, %c0_2] : memref<24x32xf32, #tpu.memory_space<vmem>>, vector<24x32xf32>
    %cst_3 = arith.constant dense<0.000000e+00> : vector<24x8xf32>
    %4 = tpu.matmul %3, %2, %cst_3 {dimension_numbers = #tpu.dot_dimension_numbers<[1], [1], [0], [0], [0, 0, 1, 0], [], []>} : vector<24x32xf32>, vector<8x32xf32>, vector<24x8xf32> -> vector<24x8xf32>
    %c0_4 = arith.constant 0 : index
    %c0_5 = arith.constant 0 : index
    %5 = vector.load %arg3[%c0_4, %c0_5] : memref<24x1xf32, #tpu.memory_space<vmem>>, vector<24x1xf32>
    %6 = vector.broadcast %5 : vector<24x1xf32> to vector<24x8xf32>
    %7 = arith.addf %4, %6 : vector<24x8xf32>
    %c0_6 = arith.constant 0 : index
    %c0_7 = arith.constant 0 : index
    %8 = vector.load %arg4[%c0_6, %c0_7] : memref<24x8xf32, #tpu.memory_space<vmem>>, vector<24x8xf32>
    tpu.vector_store %arg4[%c0_6, %c0_7], %7 {strides = array<i32>} : memref<24x8xf32, #tpu.memory_space<vmem>>, vector<24x8xf32>,
    return
  }
  func.func @transform_0(%arg0: i32) -> (i32, i32) {
    %c0_i32 = arith.constant 0 : i32
    %c0_i32_0 = arith.constant 0 : i32
    return %arg0, %c0_i32 : i32, i32
  }
  func.func @transform_1(%arg0: i32) -> (i32, i32) {
    %c0_i32 = arith.constant 0 : i32
    %c0_i32_0 = arith.constant 0 : i32
    %c0_i32_1 = arith.constant 0 : i32
    return %c0_i32, %c0_i32_0 : i32, i32
  }
  func.func @transform_2(%arg0: i32) -> (i32, i32) {
    %c0_i32 = arith.constant 0 : i32
    %c0_i32_0 = arith.constant 0 : i32
    %c0_i32_1 = arith.constant 0 : i32
    return %c0_i32, %c0_i32_0 : i32, i32
  }
  func.func @transform_3(%arg0: i32) -> (i32, i32) {
    %c0_i32 = arith.constant 0 : i32
    %c0_i32_0 = arith.constant 0 : i32
    return %c0_i32, %arg0 : i32, i32
  }
}

</mosaic_0001>

<llo_original>
// kernel: tpu_custom_call.1
$region0: #{tpu_custom_call.1}
  #allocation0 [shape = 'u32[]', space=smem, size = 0x4, offset = 0x4, fixed_abs, tag = 'smem constant byte address 0x4 - core index']
  #allocation1 [shape = 'u32[144,128]{1,0:T(1,128)}', space=vmem, size = 0x12000, scoped, tag = 'internal scratch']
  %s0 = inlined_call_operand.hbm [shape: f32[8,32], index: 0, kind: input, shape index: {}]
  %s1 = inlined_call_operand.vmem [shape: f32[24,32], index: 1, kind: input, shape index: {}]
  %s2 = inlined_call_operand.vmem [shape: f32[24,1], index: 2, kind: input, shape index: {}]
  %s3 = inlined_call_operand.vmem [shape: f32[24,8], index: 3, kind: output, shape index: {}]
  %s4 = sld [smem:[#allocation0]]
  $region26: #{tpu_custom_call.1} parent=0
    _
  %s6 = ssub.s32 1, %s4
  %s7 = scalar_select 0, %s6, %s4
  $region1: #{tpu_custom_call.1} parent=0
    #allocation2 [shape = 'u8[4096]{0}', space=vmem, size = 0x1000, scoped, tag = 'input window, operand 0, single buffered']
    #allocation3 [shape = 's32[1]{0}', space=sflag, size = 0x4, scoped, tag = 'scoped memory for tpu_custom_call.1']
    %8 = vsyncpa [#allocation3], 0
    // Predicated region
    $region2: #{tpu_custom_call.1} parent=1 // pred_check
      _
    $region3: #{tpu_custom_call.1} parent=1 // pred_check_branch
      %10 = sbr.rel (0) target = $region5
    $region4: #{tpu_custom_call.1} parent=1 // pred_region
      %s12 = ssub.s32 128, 128
      %13 = vsyncadd [#allocation3], %s12
      %s15 = sshll.u32 [#allocation2], 4
      %s16 = int_to_ptr.vmem [resolvable:$true] %s15
      %18 = dma.hbm_to_vmem [thread:$0]  %s0, 128, %s16, [#allocation3]
    $region5: #{tpu_custom_call.1} parent=1 // pred_fallthru
      _
    // Predicated region
    $region6: #{tpu_custom_call.1} parent=1 // pred_check
      _
    $region7: #{tpu_custom_call.1} parent=1 // pred_check_branch
      %20 = sbr.rel (0) target = $region9
    $region8: #{tpu_custom_call.1} parent=1 // pred_region
      _
    $region9: #{tpu_custom_call.1} parent=1 // pred_fallthru
      _
    // Predicated region
    $region10: #{tpu_custom_call.1} parent=1 // pred_check
      _
    $region11: #{tpu_custom_call.1} parent=1 // pred_check_branch
      %22 = sbr.rel (0) target = $region13
    $region12: #{tpu_custom_call.1} parent=1 // pred_region
      _
    $region13: #{tpu_custom_call.1} parent=1 // pred_fallthru
      _
    // Predicated region
    $region14: #{tpu_custom_call.1} parent=1 // pred_check
      _
    $region15: #{tpu_custom_call.1} parent=1 // pred_check_branch
      %24 = sbr.rel (0) target = $region17
    $region16: #{tpu_custom_call.1} parent=1 // pred_region
      %25 = dma.done [#allocation3], 128
    $region17: #{tpu_custom_call.1} parent=1 // pred_fallthru
      _
    %v26 = vld [vmem:[#allocation2] sm:$0xff]
    %v27 = vmax.f32 %v26, 0.0
    %v28 = vld [vmem:[%s1] sm:$0xff]
    %v29 = vld [vmem:[%s1 + $0x8] sm:$0xff]
    %v30 = vld [vmem:[%s1 + $0x10] sm:$0xff]
    %v31 = vld [vmem:[%s2] sm:$0xff]
    %v32 = vld [vmem:[%s2 + $0x8] sm:$0xff]
    %v33 = vld [vmem:[%s2 + $0x10] sm:$0xff]
    %35 = vset.pattern.permute.xlu0 0
    %36 = vperm.xlu0 %35, %v31
    %v37 = vpop.permute.xlu0 %36
    %40 = vset.pattern.permute.xlu0 0
    %41 = vperm.xlu0 %40, %v32
    %v42 = vpop.permute.xlu0 %41
    %45 = vset.pattern.permute.xlu0 0
    %46 = vperm.xlu0 %45, %v33
    %v47 = vpop.permute.xlu0 %46
    %vm49 = vcmask 261120
    %v51 = vsel %vm49, %v28, 0
    %v54 = vsel %vm49, %v29, 0
    %v57 = vsel %vm49, %v30, 0
    %v60 = vsel %vm49, %v27, 0
    %62 = vmatprep.subr.mxu0 0.0
    %63 = vmatpush1.xpose.msra.mxu0 %v60
    %64 = vmatprep.subr.mxu0 0.0
    %65 = vmatpush1.xpose.msra.mxu0 0.0
    %66 = vmatprep.subr.mxu0 0.0
    %67 = vmatpush1.xpose.msra.mxu0 0.0
    %68 = vmatprep.subr.mxu0 0.0
    %69 = vmatpush1.xpose.msra.mxu0 0.0
    %70 = vmatprep.subr.mxu0 0.0
    %71 = vmatpush1.xpose.msra.mxu0 0.0
    %72 = vmatprep.subr.mxu0 0.0
    %73 = vmatpush1.xpose.msra.mxu0 0.0
    %74 = vmatprep.subr.mxu0 0.0
    %75 = vmatpush1.xpose.msra.mxu0 0.0
    %76 = vmatprep.subr.mxu0 0.0
    %77 = vmatpush1.xpose.msra.mxu0 0.0
    %78 = vmatprep.subr.mxu0 0.0
    %79 = vmatpush1.xpose.msra.mxu0 0.0
    %80 = vmatprep.subr.mxu0 0.0
    %81 = vmatpush1.xpose.msra.mxu0 0.0
    %82 = vmatprep.subr.mxu0 0.0
    %83 = vmatpush1.xpose.msra.mxu0 0.0
    %84 = vmatprep.subr.mxu0 0.0
    %85 = vmatpush1.xpose.msra.mxu0 0.0
    %86 = vmatprep.subr.mxu0 0.0
    %87 = vmatpush1.xpose.msra.mxu0 0.0
    %88 = vmatprep.subr.mxu0 0.0
    %89 = vmatpush1.xpose.msra.mxu0 0.0
    %90 = vmatprep.subr.mxu0 0.0
    %91 = vmatpush1.xpose.msra.mxu0 0.0
    %92 = vmatprep.subr.mxu0 0.0
    %93 = vmatpush1.xpose.msra.mxu0 0.0
    %94 = vmatprep.subr.mxu0 0.0
    %95 = vmatpush1.xpose.msra.mxu0 0.0
    %96 = vmatprep.subr.mxu0 0.0
    %97 = vmatpush1.xpose.msra.mxu0 0.0
    %98 = vmatprep.subr.mxu0 0.0
    %99 = vmatpush1.xpose.msra.mxu0 0.0
    %100 = vmatprep.subr.mxu0 0.0
    %101 = vmatpush1.xpose.msra.mxu0 0.0
    %102 = vmatprep.subr.mxu0 0.0
    %103 = vmatpush1.xpose.msra.mxu0 0.0
    %104 = vmatprep.subr.mxu0 0.0
    %105 = vmatpush1.xpose.msra.mxu0 0.0
    %106 = vmatprep.subr.mxu0 0.0
    %107 = vmatpush1.xpose.msra.mxu0 0.0
    %108 = vmatprep.subr.mxu0 0.0
    %109 = vmatpush1.xpose.msra.mxu0 0.0
    %110 = vmatprep.subr.mxu0 0.0
    %111 = vmatpush1.xpose.msra.mxu0 0.0
    %112 = vmatprep.subr.mxu0 0.0
    %113 = vmatpush1.xpose.msra.mxu0 0.0
    %114 = vmatprep.subr.mxu0 0.0
    %115 = vmatpush1.xpose.msra.mxu0 0.0
    %116 = vmatprep.subr.mxu0 0.0
    %117 = vmatpush1.xpose.msra.mxu0 0.0
    %118 = vmatprep.subr.mxu0 0.0
    %119 = vmatpush1.xpose.msra.mxu0 0.0
    %120 = vmatprep.subr.mxu0 0.0
    %121 = vmatpush1.xpose.msra.mxu0 0.0
    %122 = vmatprep.subr.mxu0 0.0
    %123 = vmatpush1.xpose.msra.mxu0 0.0
    %124 = vmatprep.subr.mxu0 0.0
    %125 = vmatpush1.xpose.msra.mxu0 0.0
    %126 = vmatprep.mubr.f32.mxu0 0.0
    %127 = vmatmul.mubr.f32.gmra.mrb[0].mxu0 %v51
    %v128 = vpop.f32.mrb[0].mxu0
    %v129 = vadd.f32 %v37, %v128
    %v130 = vpop.f32.mrb[0].mxu0
    %131 = vmatprep.mubr.f32.mxu0 0.0
    %132 = vmatmul.mubr.f32.gmra.mrb[0].mxu0 %v54
    %v133 = vpop.f32.mrb[0].mxu0
    %v134 = vadd.f32 %v42, %v133
    %v135 = vpop.f32.mrb[0].mxu0
    %136 = vmatprep.mubr.f32.mxu0 0.0
    %137 = vmatmul.mubr.f32.gmra.mrb[0].mxu0 %v57
    %v138 = vpop.f32.mrb[0].mxu0
    %v139 = vadd.f32 %v47, %v138
    %v140 = vpop.f32.mrb[0].mxu0
    %141 = vdwg.mxu0
    %vm142 = vcmask 64512
    %143 = vst.msk [vmem:[%s3] sm:$0xff] %vm142, %v129
    %144 = vst.msk [vmem:[%s3 + $0x8] sm:$0xff] %vm142, %v134
    %145 = vst.msk [vmem:[%s3 + $0x10] sm:$0xff] %vm142, %v139
    // Predicated region
    $region18: #{tpu_custom_call.1} parent=1 // pred_check
      _
    $region19: #{tpu_custom_call.1} parent=1 // pred_check_branch
      %147 = sbr.rel (0) target = $region21
    $region20: #{tpu_custom_call.1} parent=1 // pred_region
      _
    $region21: #{tpu_custom_call.1} parent=1 // pred_fallthru
      _
    // Predicated region
    $region22: #{tpu_custom_call.1} parent=1 // pred_check
      _
    $region23: #{tpu_custom_call.1} parent=1 // pred_check_branch
      %149 = sbr.rel (0) target = $region25
    $region24: #{tpu_custom_call.1} parent=1 // pred_region
      _
    $region25: #{tpu_custom_call.1} parent=1 // pred_fallthru
      _
    %150 = vsyncpa [#allocation3], 1

</llo_original>
